<compile_context>
chip_gen: v7x
topology: tpu7x:2x2x1
jax: 0.10.0
libtpu: 0.0.40
codegen_flags: <defaults>
</compile_context>

<pallas_src>
import functools
import math

import jax
import jax.numpy as jnp
from jax.experimental import pallas as pl
from jax.experimental.pallas import tpu as pltpu


_LANE = 128
_MAX_BLOCK_BYTES = 4 * 1024 * 1024   # 4 MiB per input block (<= ~16 MiB live VMEM)
_KINDS = ("ReLU", "PReLU", "ELU", "LReLU")


def _xrelu_kernel(x_ref, o_ref, *, kind, alpha):
    """Elementwise activation on one (tm, cols) tile."""
    x = x_ref[...]
    if kind == "ReLU":
        y = jnp.maximum(x, 0.0)
    elif kind == "PReLU":
        y = jnp.where(x >= 0.0, x, alpha * x)
    elif kind == "ELU":
        # F.elu(x, alpha=1): x if x > 0 else exp(x) - 1  (EUP handles the exp)
        y = jnp.where(x > 0.0, x, jnp.expm1(x))
    else:  # "LReLU"
        y = jnp.where(x >= 0.0, x, 0.01 * x)
    o_ref[...] = y.astype(o_ref.dtype)


def _launch(x2d, kind, alpha):
    """Launch the elementwise kernel on a lane-dense (rows, cols) view."""
    rows, cols = x2d.shape
    itemsize = x2d.dtype.itemsize
    total = rows * cols

    # Largest row-tile (multiple of 8) under the per-block byte budget.
    max_tm = max(8, (_MAX_BLOCK_BYTES // (cols * itemsize)) // 8 * 8)
    if rows <= 8:
        tm = rows                                   # full-dim block (allowed)
    else:
        # Cap at half the rows (rounded up to a sublane multiple) so there are
        # always >= 2 grid blocks -> "parallel" shards across v7x's 2 TCs.
        half = (((rows + 1) // 2) + 7) // 8 * 8
        tm = min(max_tm, half)
    grid = (pl.cdiv(rows, tm),)                     # ragged last block is masked

    kernel = functools.partial(_xrelu_kernel, kind=kind, alpha=alpha)
    return pl.pallas_call(
        kernel,
        out_shape=jax.ShapeDtypeStruct((rows, cols), x2d.dtype),
        grid=grid,
        in_specs=[pl.BlockSpec((tm, cols), lambda i: (i, 0))],
        out_specs=pl.BlockSpec((tm, cols), lambda i: (i, 0)),
        compiler_params=pltpu.CompilerParams(
            dimension_semantics=("parallel",),
            vmem_limit_bytes=32 * 1024 * 1024,
        ),
        cost_estimate=pl.CostEstimate(
            flops=total,
            transcendentals=total if kind == "ELU" else 0,
            bytes_accessed=2 * total * itemsize,
        ),
    )(x2d)


@functools.partial(jax.jit, static_argnums=(1, 2))
def _xrelu_jit(x, kind, alpha):
    orig_shape = x.shape
    itemsize = x.dtype.itemsize
    total = x.size

    # Fast path: last dim already lane-aligned -> tile the original 2-D view,
    # zero wrapper data movement.
    if (x.ndim >= 2 and x.shape[-1] % _LANE == 0
            and 8 * x.shape[-1] * itemsize <= _MAX_BLOCK_BYTES):
        rows = math.prod(x.shape[:-1])
        cols = x.shape[-1]
        out2d = _launch(x.reshape(rows, cols), kind, alpha)
        return out2d.reshape(orig_shape)

    # Generic path: flat (rows, 128) view. Reshape is a free bitcast under jit;
    # a pad/slice pair only happens when total isn't a multiple of 128.
    flat = x.reshape(-1)
    pad = (-total) % _LANE
    if pad:
        flat = jnp.pad(flat, (0, pad))
    rows = (total + pad) // _LANE
    out2d = _launch(flat.reshape(rows, _LANE), kind, alpha)
    out_flat = out2d.reshape(-1)
    if pad:
        out_flat = out_flat[:total]
    return out_flat.reshape(orig_shape)


def xrelu(x, edge_index, kind, prelu_alpha=0.25):
    """Pallas-backed forward of xReLU.

    x           : float array of any shape (GNN node features [N, F])
    edge_index  : unused (API parity with the PyTorch module)
    kind        : 'ReLU' | 'PReLU' | 'ELU' | 'LReLU' | anything-else=identity
    prelu_alpha : Python-float PReLU slope (baked as a compile-time constant)
    """
    del edge_index  # unused by the forward pass, as in the PyTorch module
    if kind not in _KINDS:
        # Identity: skip the kernel entirely (no pointless HBM round trip).
        return x
    # TODO(synk): if prelu_alpha ever becomes a traced/learnable array, pass it
    # through an SMEM scalar instead of baking it statically.
    return _xrelu_jit(x, kind, float(prelu_alpha))


def _ref_forward(x, kind, alpha):
    """Pure-JAX reference mirroring the PyTorch forward."""
    if kind == "ReLU":
        return jnp.maximum(x, 0.0)
    elif kind == "PReLU":
        return jnp.where(x >= 0.0, x, alpha * x)
    elif kind == "ELU":
        return jnp.where(x > 0.0, x, jnp.expm1(x))
    elif kind == "LReLU":
        return jnp.where(x >= 0.0, x, 0.01 * x)
    else:
        return x


if __name__ == "__main__":
    key = jax.random.PRNGKey(0)
    k_x, k_e, k_big, k_rag = jax.random.split(key, 4)

    # Small GNN-style shapes: 8 nodes, 32 features, 16 edges.
    N, F, E = 8, 32, 16
    x = jax.random.normal(k_x, (N, F), dtype=jnp.float32)
    edge_index = jax.random.randint(k_e, (2, E), 0, N, dtype=jnp.int32)

    # PyTorch PReLU default weight = 0.25.
    prelu_alpha = 0.25

    # Exercises the lane-aligned fast path and the multi-block (grid=2) path.
    x_big = jax.random.normal(k_big, (2048, 512), dtype=jnp.float32)
    # Exercises the generic path with a ragged total (pad/slice branch).
    x_rag = jax.random.normal(k_rag, (7, 33), dtype=jnp.float32)

    ok = True
    for kind in ["ReLU", "PReLU", "ELU", "LReLU", "identity"]:
        for xin in (x, x_big, x_rag):
            out = jax.block_until_ready(xrelu(xin, edge_index, kind, prelu_alpha))
            ref = _ref_forward(xin, kind, prelu_alpha)
            if out.shape != ref.shape or not jnp.allclose(out, ref, atol=1e-6, rtol=1e-6):
                ok = False
                print(f"MISMATCH for kind={kind} shape={xin.shape}")

    if ok:
        print("KERNEL_OK")
</pallas_src>

<mosaic_0001>
module attributes {stable_mosaic.version = 11 : i64} {
  func.func @_xrelu_kernel(%arg0: i32, %arg1: memref<2x128xf32, #tpu.memory_space<vmem>>, %arg2: memref<2x128xf32, #tpu.memory_space<vmem>>) attributes {dimension_semantics = [#tpu.dimension_semantics<parallel>], iteration_bounds = array<i64: 1>, scalar_prefetch = 0 : i64, scratch_operands = 0 : i64, tpu.core_type = #tpu.core_type<tc>, window_params = [{transform_indices = @transform_0, window_bounds = array<i64: 2, 128>}, {transform_indices = @transform_1, window_bounds = array<i64: 2, 128>}]} {
    %c0 = arith.constant 0 : index
    %c0_0 = arith.constant 0 : index
    %0 = vector.load %arg1[%c0, %c0_0] : memref<2x128xf32, #tpu.memory_space<vmem>>, vector<2x128xf32>
    %cst = arith.constant 0.000000e+00 : f32
    %1 = vector.broadcast %cst : f32 to vector<2x128xf32>
    %2 = arith.maximumf %0, %1 : vector<2x128xf32>
    %c0_1 = arith.constant 0 : index
    %c0_2 = arith.constant 0 : index
    %3 = vector.load %arg2[%c0_1, %c0_2] : memref<2x128xf32, #tpu.memory_space<vmem>>, vector<2x128xf32>
    tpu.vector_store %arg2[%c0_1, %c0_2], %2 {strides = array<i32>} : memref<2x128xf32, #tpu.memory_space<vmem>>, vector<2x128xf32>,
    return
  }
  func.func @transform_0(%arg0: i32) -> (i32, i32) {
    %c0_i32 = arith.constant 0 : i32
    %c0_i32_0 = arith.constant 0 : i32
    return %arg0, %c0_i32 : i32, i32
  }
  func.func @transform_1(%arg0: i32) -> (i32, i32) {
    %c0_i32 = arith.constant 0 : i32
    %c0_i32_0 = arith.constant 0 : i32
    return %arg0, %c0_i32 : i32, i32
  }
}

</mosaic_0001>

<llo_original>
// kernel: _xrelu_jit.1
$region0: #{_xrelu_jit.1}
  #allocation0 [shape = 'u32[]', space=smem, size = 0x4, offset = 0x4, fixed_abs, tag = 'smem constant byte address 0x4 - core index']
  #allocation1 [shape = 'u32[144,128]{1,0:T(1,128)}', space=vmem, size = 0x12000, scoped, tag = 'internal scratch']
  %s0 = inlined_call_operand.vmem [shape: f32[2,128], index: 0, kind: input, shape index: {}]
  %s1 = inlined_call_operand.vmem [shape: f32[2,128], index: 1, kind: output, shape index: {}]
  %s2 = sld [smem:[#allocation0]]
  $region14: #{_xrelu_jit.1} parent=0
    _
  %s4 = ssub.s32 1, %s2
  %s5 = scalar_select 0, %s4, %s2
  // Predicated region
  $region2: #{_xrelu_jit.1} parent=0 // pred_check
    _
  $region3: #{_xrelu_jit.1} parent=0 // pred_check_branch
    %7 = sbr.rel (0) target = $region5
  $region4: #{_xrelu_jit.1} parent=0 // pred_region
    _
  $region5: #{_xrelu_jit.1} parent=0 // pred_fallthru
    _
  %v8 = vld [vmem:[%s0] sm:$0x3]
  %v9 = vmax.f32 %v8, 0.0
  %10 = vst [vmem:[%s1] sm:$0x3] %v9
  // Predicated region
  $region6: #{_xrelu_jit.1} parent=0 // pred_check
    _
  $region7: #{_xrelu_jit.1} parent=0 // pred_check_branch
    %12 = sbr.rel (0) target = $region9
  $region8: #{_xrelu_jit.1} parent=0 // pred_region
    _
  $region9: #{_xrelu_jit.1} parent=0 // pred_fallthru
    _
  // Predicated region
  $region10: #{_xrelu_jit.1} parent=0 // pred_check
    _
  $region11: #{_xrelu_jit.1} parent=0 // pred_check_branch
    %14 = sbr.rel (0) target = $region13
  $region12: #{_xrelu_jit.1} parent=0 // pred_region
    _
  $region13: #{_xrelu_jit.1} parent=0 // pred_fallthru
    _

</llo_original>
